<compile_context>
chip_gen: v7x
topology: tpu7x:2x2x1
jax: 0.10.0
libtpu: 0.0.40
codegen_flags: <defaults>
</compile_context>

<pallas_src>
import numpy as np
import jax
import jax.numpy as jnp
from jax import lax
from jax.experimental import pallas as pl
from jax.experimental.pallas import tpu as pltpu

# ---- SH constants (same as the PyTorch module) ------------------------------
A0 = np.pi
A1 = 2.0 * np.pi / np.sqrt(3.0)
A2 = 2.0 * np.pi / np.sqrt(8.0)
C0 = 1.0 / np.sqrt(4.0 * np.pi)
C1 = np.sqrt(3.0) / np.sqrt(4.0 * np.pi)
C2 = 3.0 * np.sqrt(5.0) / np.sqrt(12.0 * np.pi)
D0 = 0.5 / np.sqrt(3.0)

LANE = 128


def _round_up(x, m):
    return ((x + m - 1) // m) * m


# ---- Kernel 1: per-face normals (cross product + rsqrt-normalize) -----------
def _face_normal_kernel(tv_ref, n_ref):
    # tv_ref: (9, 1, Rf, 128)  -> dim0 = corner*3 + channel, lane-dense face slabs
    v1x, v1y, v1z = tv_ref[0, 0], tv_ref[1, 0], tv_ref[2, 0]
    v2x, v2y, v2z = tv_ref[3, 0], tv_ref[4, 0], tv_ref[5, 0]
    v3x, v3y, v3z = tv_ref[6, 0], tv_ref[7, 0], tv_ref[8, 0]
    e1x, e1y, e1z = v2x - v1x, v2y - v1y, v2z - v1z
    e2x, e2y, e2z = v3x - v1x, v3y - v1y, v3z - v1z
    cx = e1y * e2z - e1z * e2y
    cy = e1z * e2x - e1x * e2z
    cz = e1x * e2y - e1y * e2x
    # nn.functional.normalize(eps=1e-12): clamping sumsq at 1e-24 == clamping norm at 1e-12
    inv = lax.rsqrt(jnp.maximum(cx * cx + cy * cy + cz * cz, 1e-24))
    n_ref[0, 0] = cx * inv
    n_ref[1, 0] = cy * inv
    n_ref[2, 0] = cz * inv


def face_normals_pallas(tv):
    # tv: (9, B, Rf, 128) float32
    _, B, Rf, L = tv.shape
    return pl.pallas_call(
        _face_normal_kernel,
        out_shape=jax.ShapeDtypeStruct((3, B, Rf, L), jnp.float32),
        grid=(B,),
        in_specs=[pl.BlockSpec((9, 1, Rf, L), lambda b: (0, b, 0, 0))],
        out_specs=pl.BlockSpec((3, 1, Rf, L), lambda b: (0, b, 0, 0)),
        compiler_params=pltpu.CompilerParams(dimension_semantics=("parallel",)),
    )(tv)


# ---- Kernel 2: vertex-normal normalize + SH lighting (VPU FMAs) + texture ----
def _illum_kernel(gamma_ref, vn_ref, tex_ref, out_ref):
    b = pl.program_id(0)
    nx0, ny0, nz0 = vn_ref[0, 0], vn_ref[1, 0], vn_ref[2, 0]       # (Rv, 128)
    # torch: v_norm / v_norm.norm() (no eps) -- rsqrt + mul, faithful to reference
    inv = lax.rsqrt(nx0 * nx0 + ny0 * ny0 + nz0 * nz0)
    nx, ny, nz = nx0 * inv, ny0 * inv, nz0 * inv

    a1c1 = np.float32(A1 * C1)
    a2c2 = np.float32(A2 * C2)
    h0 = np.float32(A0 * C0)                       # constant SH term (scalar)
    h1 = -a1c1 * ny
    h2 = a1c1 * nz
    h3 = -a1c1 * nx
    h4 = a2c2 * nx * ny
    h5 = -a2c2 * ny * nz
    h6 = np.float32(A2 * C2 * D0) * (3.0 * nz * nz - 1.0)
    h7 = -a2c2 * nx * nz
    h8 = np.float32(A2 * C2 * 0.5) * (nx * nx - ny * ny)

    # lighting[c] = sum_j gamma[b, c, j] * H_j   (gamma scalars live in SMEM; no MXU,
    # no (9,V) H materialization). +0.8 ambient bias applied to the j=0 coefficient here.
    for c in range(3):
        g0 = gamma_ref[b, 9 * c + 0] + 0.8
        light = (g0 * h0
                 + gamma_ref[b, 9 * c + 1] * h1
                 + gamma_ref[b, 9 * c + 2] * h2
                 + gamma_ref[b, 9 * c + 3] * h3
                 + gamma_ref[b, 9 * c + 4] * h4
                 + gamma_ref[b, 9 * c + 5] * h5
                 + gamma_ref[b, 9 * c + 6] * h6
                 + gamma_ref[b, 9 * c + 7] * h7
                 + gamma_ref[b, 9 * c + 8] * h8)
        out_ref[c, 0] = tex_ref[c, 0] * light


def illumination_pallas(gamma, v_norm, tex):
    # gamma: (B, 27) in SMEM; v_norm, tex: (3, B, Rv, 128) in VMEM
    _, B, Rv, L = v_norm.shape
    return pl.pallas_call(
        _illum_kernel,
        out_shape=jax.ShapeDtypeStruct((3, B, Rv, L), jnp.float32),
        grid=(B,),
        in_specs=[
            pl.BlockSpec(memory_space=pltpu.MemorySpace.SMEM),
            pl.BlockSpec((3, 1, Rv, L), lambda b: (0, b, 0, 0)),
            pl.BlockSpec((3, 1, Rv, L), lambda b: (0, b, 0, 0)),
        ],
        out_specs=pl.BlockSpec((3, 1, Rv, L), lambda b: (0, b, 0, 0)),
        compiler_params=pltpu.CompilerParams(dimension_semantics=("parallel",)),
    )(gamma, v_norm, tex)


# ---- Wrapper mirroring Render.forward (up to the rasterizer) -----------------
def render_forward(rott_geometry, texture, diffuse_sh, tris, vert_tris):
    """
    rott_geometry: (B, V, 3) float32
    texture:       (B, 3, V) float32  (as passed to Render.forward, pre-permute)
    diffuse_sh:    (B, 27)   float32
    tris:          (F, 3)    int32
    vert_tris:     (V, K)    int32
    returns face_color: (B, V, 3) float32  (per-vertex shaded color)
    """
    rott_geometry = rott_geometry.astype(jnp.float32)
    texture = texture.astype(jnp.float32)
    diffuse_sh = diffuse_sh.astype(jnp.float32)

    B, V, _ = rott_geometry.shape
    F = tris.shape[0]
    K = vert_tris.shape[1]
    Fp = _round_up(F, LANE)
    Vp = _round_up(V, LANE)
    Rf = Fp // LANE
    Rv = Vp // LANE

    # -- glue: single packed face-vertex gather, re-laid lane-dense (9, B, Rf, 128) --
    tri_flat = tris.reshape(-1)                                  # (3F,) f-major, corner-minor
    tv = jnp.take(rott_geometry, tri_flat, axis=1)               # (B, 3F, 3)
    tv = tv.reshape(B, F, 3, 3)                                  # [b, f, corner, ch]
    tv = jnp.transpose(tv, (2, 3, 0, 1)).reshape(9, B, F)        # [corner*3+ch, b, f]
    tv = jnp.pad(tv, ((0, 0), (0, 0), (0, Fp - F)))
    tv = tv.reshape(9, B, Rf, LANE)

    tri_normal = face_normals_pallas(tv)                         # (3, B, Rf, 128)

    # -- glue: per-vertex adjacency gather + K-sum (stays in XLA; see TODO at top) --
    tn = tri_normal.reshape(3, B, Fp)
    v_norm = jnp.take(tn, vert_tris.reshape(-1), axis=2)         # (3, B, V*K)
    v_norm = v_norm.reshape(3, B, V, K).sum(axis=3)              # (3, B, V)
    v_norm = jnp.pad(v_norm, ((0, 0), (0, 0), (0, Vp - V)))
    v_norm = v_norm.reshape(3, B, Rv, LANE)

    tex = jnp.transpose(texture, (1, 0, 2))                      # (3, B, V) channel-major
    tex = jnp.pad(tex, ((0, 0), (0, 0), (0, Vp - V))).reshape(3, B, Rv, LANE)

    gamma = diffuse_sh.reshape(B, 27)                            # +0.8 bias added in-kernel

    face_color = illumination_pallas(gamma, v_norm, tex)         # (3, B, Rv, 128)
    face_color = face_color.reshape(3, B, Vp)[:, :, :V]          # (3, B, V)
    # Return the torch Illumination_layer convention (B, V, 3); the downstream consumer
    # (pytorch3d TexturesVertex) wants vertex-major anyway.
    return jnp.transpose(face_color, (1, 2, 0))
    # TODO(synk): Meshes + MeshRasterizer + softmax_rgb_blend + clamp + NCHW permute.


# ---- Pure-JAX reference (matches the PyTorch math) ---------------------------
def reference_forward(rott_geometry, texture, diffuse_sh, tris, vert_tris):
    B, V, _ = rott_geometry.shape
    v1 = rott_geometry[:, tris[:, 0], :]
    v2 = rott_geometry[:, tris[:, 1], :]
    v3 = rott_geometry[:, tris[:, 2], :]
    nnorm = jnp.cross(v2 - v1, v3 - v1)
    tri_normal = nnorm / jnp.maximum(
        jnp.linalg.norm(nnorm, axis=2, keepdims=True), 1e-12)
    v_norm = tri_normal[:, vert_tris, :].sum(axis=2)                 # (B, V, 3)
    vert_normal = v_norm / jnp.linalg.norm(v_norm, axis=2, keepdims=True)

    tex = jnp.transpose(texture, (0, 2, 1))                          # (B, V, 3)
    gamma = diffuse_sh.reshape(B, 3, 9)
    gamma = gamma.at[:, :, 0].add(0.8)
    gamma = jnp.transpose(gamma, (0, 2, 1))                          # (B, 9, 3)

    nx, ny, nz = vert_normal[..., 0], vert_normal[..., 1], vert_normal[..., 2]
    H = jnp.stack(
        [
            jnp.ones_like(nx) * (A0 * C0),
            -A1 * C1 * ny,
            A1 * C1 * nz,
            -A1 * C1 * nx,
            A2 * C2 * nx * ny,
            -A2 * C2 * ny * nz,
            A2 * C2 * D0 * (3.0 * nz * nz - 1.0),
            -A2 * C2 * nx * nz,
            A2 * C2 * 0.5 * (nx * nx - ny * ny),
        ],
        axis=2,
    )                                                                # (B, V, 9)
    lighting = jnp.einsum("bvj,bjc->bvc", H, gamma)
    return tex * lighting


if __name__ == "__main__":
    B, V, F, K = 2, 1024, 2048, 8

    key = jax.random.PRNGKey(0)
    k_geo, k_tex, k_sh, k_tri, k_vt = jax.random.split(key, 5)

    rott_geometry = jax.random.normal(k_geo, (B, V, 3), dtype=jnp.float32)
    texture = jax.random.uniform(k_tex, (B, 3, V), dtype=jnp.float32) * 255.0
    diffuse_sh = jax.random.normal(k_sh, (B, 27), dtype=jnp.float32) * 0.1

    # deterministic synthetic topology (stands in for ./flame-data/{tris,vert_tris}.txt)
    tris = jax.random.randint(k_tri, (F, 3), 0, V, dtype=jnp.int32)
    vert_tris = jax.random.randint(k_vt, (V, K), 0, F, dtype=jnp.int32)

    out = render_forward(rott_geometry, texture, diffuse_sh, tris, vert_tris)
    out = jax.block_until_ready(out)

    ref = reference_forward(rott_geometry, texture, diffuse_sh, tris, vert_tris)
    ref = jax.block_until_ready(ref)

    assert out.shape == (B, V, 3), out.shape
    np.testing.assert_allclose(np.asarray(out), np.asarray(ref), rtol=5e-4, atol=5e-3)

    print("KERNEL_OK")
</pallas_src>

<mosaic_0001>
module attributes {stable_mosaic.version = 11 : i64} {
  func.func @_face_normal_kernel(%arg0: i32, %arg1: memref<9x1x16x128xf32, #tpu.memory_space<vmem>>, %arg2: memref<3x1x16x128xf32, #tpu.memory_space<vmem>>) attributes {dimension_semantics = [#tpu.dimension_semantics<parallel>], iteration_bounds = array<i64: 2>, scalar_prefetch = 0 : i64, scratch_operands = 0 : i64, tpu.core_type = #tpu.core_type<tc>, window_params = [{transform_indices = @transform_0, window_bounds = array<i64: 9, 1, 16, 128>}, {transform_indices = @transform_1, window_bounds = array<i64: 3, 1, 16, 128>}]} {
    %c0 = arith.constant 0 : index
    %c0_0 = arith.constant 0 : index
    %c0_1 = arith.constant 0 : index
    %c0_2 = arith.constant 0 : index
    %0 = vector.load %arg1[%c0, %c0_0, %c0_1, %c0_2] : memref<9x1x16x128xf32, #tpu.memory_space<vmem>>, vector<1x1x16x128xf32>
    %1 = vector.shape_cast %0 : vector<1x1x16x128xf32> to vector<16x128xf32>
    %c1 = arith.constant 1 : index
    %c0_3 = arith.constant 0 : index
    %c0_4 = arith.constant 0 : index
    %c0_5 = arith.constant 0 : index
    %2 = vector.load %arg1[%c1, %c0_3, %c0_4, %c0_5] : memref<9x1x16x128xf32, #tpu.memory_space<vmem>>, vector<1x1x16x128xf32>
    %3 = vector.shape_cast %2 : vector<1x1x16x128xf32> to vector<16x128xf32>
    %c2 = arith.constant 2 : index
    %c0_6 = arith.constant 0 : index
    %c0_7 = arith.constant 0 : index
    %c0_8 = arith.constant 0 : index
    %4 = vector.load %arg1[%c2, %c0_6, %c0_7, %c0_8] : memref<9x1x16x128xf32, #tpu.memory_space<vmem>>, vector<1x1x16x128xf32>
    %5 = vector.shape_cast %4 : vector<1x1x16x128xf32> to vector<16x128xf32>
    %c3 = arith.constant 3 : index
    %c0_9 = arith.constant 0 : index
    %c0_10 = arith.constant 0 : index
    %c0_11 = arith.constant 0 : index
    %6 = vector.load %arg1[%c3, %c0_9, %c0_10, %c0_11] : memref<9x1x16x128xf32, #tpu.memory_space<vmem>>, vector<1x1x16x128xf32>
    %7 = vector.shape_cast %6 : vector<1x1x16x128xf32> to vector<16x128xf32>
    %c4 = arith.constant 4 : index
    %c0_12 = arith.constant 0 : index
    %c0_13 = arith.constant 0 : index
    %c0_14 = arith.constant 0 : index
    %8 = vector.load %arg1[%c4, %c0_12, %c0_13, %c0_14] : memref<9x1x16x128xf32, #tpu.memory_space<vmem>>, vector<1x1x16x128xf32>
    %9 = vector.shape_cast %8 : vector<1x1x16x128xf32> to vector<16x128xf32>
    %c5 = arith.constant 5 : index
    %c0_15 = arith.constant 0 : index
    %c0_16 = arith.constant 0 : index
    %c0_17 = arith.constant 0 : index
    %10 = vector.load %arg1[%c5, %c0_15, %c0_16, %c0_17] : memref<9x1x16x128xf32, #tpu.memory_space<vmem>>, vector<1x1x16x128xf32>
    %11 = vector.shape_cast %10 : vector<1x1x16x128xf32> to vector<16x128xf32>
    %c6 = arith.constant 6 : index
    %c0_18 = arith.constant 0 : index
    %c0_19 = arith.constant 0 : index
    %c0_20 = arith.constant 0 : index
    %12 = vector.load %arg1[%c6, %c0_18, %c0_19, %c0_20] : memref<9x1x16x128xf32, #tpu.memory_space<vmem>>, vector<1x1x16x128xf32>
    %13 = vector.shape_cast %12 : vector<1x1x16x128xf32> to vector<16x128xf32>
    %c7 = arith.constant 7 : index
    %c0_21 = arith.constant 0 : index
    %c0_22 = arith.constant 0 : index
    %c0_23 = arith.constant 0 : index
    %14 = vector.load %arg1[%c7, %c0_21, %c0_22, %c0_23] : memref<9x1x16x128xf32, #tpu.memory_space<vmem>>, vector<1x1x16x128xf32>
    %15 = vector.shape_cast %14 : vector<1x1x16x128xf32> to vector<16x128xf32>
    %c8 = arith.constant 8 : index
    %c0_24 = arith.constant 0 : index
    %c0_25 = arith.constant 0 : index
    %c0_26 = arith.constant 0 : index
    %16 = vector.load %arg1[%c8, %c0_24, %c0_25, %c0_26] : memref<9x1x16x128xf32, #tpu.memory_space<vmem>>, vector<1x1x16x128xf32>
    %17 = vector.shape_cast %16 : vector<1x1x16x128xf32> to vector<16x128xf32>
    %18 = arith.subf %7, %1 : vector<16x128xf32>
    %19 = arith.subf %9, %3 : vector<16x128xf32>
    %20 = arith.subf %11, %5 : vector<16x128xf32>
    %21 = arith.subf %13, %1 : vector<16x128xf32>
    %22 = arith.subf %15, %3 : vector<16x128xf32>
    %23 = arith.subf %17, %5 : vector<16x128xf32>
    %24 = arith.mulf %19, %23 : vector<16x128xf32>
    %25 = arith.mulf %20, %22 : vector<16x128xf32>
    %26 = arith.subf %24, %25 : vector<16x128xf32>
    %27 = arith.mulf %20, %21 : vector<16x128xf32>
    %28 = arith.mulf %18, %23 : vector<16x128xf32>
    %29 = arith.subf %27, %28 : vector<16x128xf32>
    %30 = arith.mulf %18, %22 : vector<16x128xf32>
    %31 = arith.mulf %19, %21 : vector<16x128xf32>
    %32 = arith.subf %30, %31 : vector<16x128xf32>
    %33 = arith.mulf %26, %26 : vector<16x128xf32>
    %34 = arith.mulf %29, %29 : vector<16x128xf32>
    %35 = arith.addf %33, %34 : vector<16x128xf32>
    %36 = arith.mulf %32, %32 : vector<16x128xf32>
    %37 = arith.addf %35, %36 : vector<16x128xf32>
    %cst = arith.constant 1.000000e-24 : f32
    %38 = vector.broadcast %cst : f32 to vector<16x128xf32>
    %39 = arith.maximumf %37, %38 : vector<16x128xf32>
    %40 = math.rsqrt %39 : vector<16x128xf32>
    %41 = arith.mulf %26, %40 : vector<16x128xf32>
    %c0_27 = arith.constant 0 : index
    %c0_28 = arith.constant 0 : index
    %c0_29 = arith.constant 0 : index
    %c0_30 = arith.constant 0 : index
    %42 = vector.load %arg2[%c0_27, %c0_28, %c0_29, %c0_30] : memref<3x1x16x128xf32, #tpu.memory_space<vmem>>, vector<1x1x16x128xf32>
    %43 = vector.shape_cast %42 : vector<1x1x16x128xf32> to vector<16x128xf32>
    %44 = vector.shape_cast %41 : vector<16x128xf32> to vector<1x1x16x128xf32>
    tpu.vector_store %arg2[%c0_27, %c0_28, %c0_29, %c0_30], %44 {strides = array<i32>} : memref<3x1x16x128xf32, #tpu.memory_space<vmem>>, vector<1x1x16x128xf32>,
    %45 = arith.mulf %29, %40 : vector<16x128xf32>
    %c1_31 = arith.constant 1 : index
    %c0_32 = arith.constant 0 : index
    %c0_33 = arith.constant 0 : index
    %c0_34 = arith.constant 0 : index
    %46 = vector.load %arg2[%c1_31, %c0_32, %c0_33, %c0_34] : memref<3x1x16x128xf32, #tpu.memory_space<vmem>>, vector<1x1x16x128xf32>
    %47 = vector.shape_cast %46 : vector<1x1x16x128xf32> to vector<16x128xf32>
    %48 = vector.shape_cast %45 : vector<16x128xf32> to vector<1x1x16x128xf32>
    tpu.vector_store %arg2[%c1_31, %c0_32, %c0_33, %c0_34], %48 {strides = array<i32>} : memref<3x1x16x128xf32, #tpu.memory_space<vmem>>, vector<1x1x16x128xf32>,
    %49 = arith.mulf %32, %40 : vector<16x128xf32>
    %c2_35 = arith.constant 2 : index
    %c0_36 = arith.constant 0 : index
    %c0_37 = arith.constant 0 : index
    %c0_38 = arith.constant 0 : index
    %50 = vector.load %arg2[%c2_35, %c0_36, %c0_37, %c0_38] : memref<3x1x16x128xf32, #tpu.memory_space<vmem>>, vector<1x1x16x128xf32>
    %51 = vector.shape_cast %50 : vector<1x1x16x128xf32> to vector<16x128xf32>
    %52 = vector.shape_cast %49 : vector<16x128xf32> to vector<1x1x16x128xf32>
    tpu.vector_store %arg2[%c2_35, %c0_36, %c0_37, %c0_38], %52 {strides = array<i32>} : memref<3x1x16x128xf32, #tpu.memory_space<vmem>>, vector<1x1x16x128xf32>,
    return
  }
  func.func @transform_0(%arg0: i32) -> (i32, i32, i32, i32) {
    %c0_i32 = arith.constant 0 : i32
    %c0_i32_0 = arith.constant 0 : i32
    %c0_i32_1 = arith.constant 0 : i32
    %c0_i32_2 = arith.constant 0 : i32
    return %c0_i32, %arg0, %c0_i32_0, %c0_i32_1 : i32, i32, i32, i32
  }
  func.func @transform_1(%arg0: i32) -> (i32, i32, i32, i32) {
    %c0_i32 = arith.constant 0 : i32
    %c0_i32_0 = arith.constant 0 : i32
    %c0_i32_1 = arith.constant 0 : i32
    %c0_i32_2 = arith.constant 0 : i32
    return %c0_i32, %arg0, %c0_i32_0, %c0_i32_1 : i32, i32, i32, i32
  }
}

</mosaic_0001>

<llo_original>
// kernel: tpu_custom_call.1
$region0: #{tpu_custom_call.1}
  #allocation0 [shape = 'u32[]', space=smem, size = 0x4, offset = 0x4, fixed_abs, tag = 'smem constant byte address 0x4 - core index']
  #allocation1 [shape = 'u32[144,128]{1,0:T(1,128)}', space=vmem, size = 0x12000, scoped, tag = 'internal scratch']
  #allocation6 [shape = 's32[]', space=sflag, size = 0x4, offset = 0, fixed_abs, tag = 'sflag constant byte address 0x0 - dummy sync flag']
  #allocation8 [shape = 's32[]', space=sflag, size = 0x4, offset = 0, fixed_abs, tag = 'sflag constant byte address 0x0 - dummy sync flag']
  %s0 = inlined_call_operand.hbm [shape: f32[9,2,16,128], index: 0, kind: input, shape index: {}]
  %s1 = inlined_call_operand.hbm [shape: f32[3,2,16,128], index: 1, kind: output, shape index: {}]
  %s2 = sld [smem:[#allocation0]]
  $region41: #{tpu_custom_call.1} parent=0
    _
  %s4 = ssub.s32 1, %s2
  %s5 = scalar_select 0, %s4, %s2
  $region1: #{tpu_custom_call.1} parent=0
    #allocation2 [shape = 'u8[147456]{0}', space=vmem, size = 0x24000, scoped, tag = 'input window, operand 0']
    #allocation3 [shape = 's32[2]{0}', space=sflag, size = 0x8, scoped, tag = 'scoped memory for tpu_custom_call.1']
    #allocation4 [shape = 's32[2]{0}', space=sflag, size = 0x8, scoped, tag = 'scoped memory for tpu_custom_call.1']
    #allocation5 [shape = 'u8[49152]{0}', space=vmem, size = 0xc000, scoped, tag = 'output window, operand 0']
    %6 = vsyncpa [#allocation3], 0
    %s7 = scalar_lea.sflag [#allocation3], 1
    %8 = vsyncpa %s7, 0
    %9 = vsyncpa [#allocation4], 0
    %s10 = scalar_lea.sflag [#allocation4], 1
    %11 = vsyncpa %s10, 0
    loop: start=0, step=1, limit=4
    $region2: #{tpu_custom_call.1} parent=1 // loop_pre_header
      _
    $region3: #{tpu_custom_call.1} parent=1 // loop_header
      %s13 = sphi 0, %s17
      %p14 = scmp.ge.s32.totalorder %s13, 4
      %s23 = sphi 0, %s25
      %s26 = sphi 0, %s23
      %s27 = sphi 0, %s26
      %s43 = sphi 0, %s27
      %s49 = sphi 0, %s51
      %s52 = sphi 0, %s49
      %s53 = sphi 0, %s52
      %s69 = sphi 0, %s53
    $region4: #{tpu_custom_call.1} parent=1 // loop_header_branch
      %16 = sbr.rel (%p14) target = $region8
    $region5: #{tpu_custom_call.1} parent=1 // loop_body
      %s18 = ssub.s32 %s13, 1
      %s19 = ssub.s32 %s13, 2
      %s20 = sadd.s32 %s13, 1
      %s21 = ssub.s32 %s13, %s20
      %p22 = scmp.eq.s32.totalorder %s21, 0
      %s24 = sadd.s32 %s23, 1
      %s25 = scalar_select %p22, %s23, %s24
      %p28 = pneg %p22
      %p29 = scmp.eq.s32.totalorder %s13, 1
      %p30 = por %p28, %p29
      %p31 = scmp.ne.s32.totalorder %s23, %s26
      %p32 = scmp.eq.s32.totalorder %s13, 0
      %p33 = por %p31, %p32
      %p34 = scmp.ne.s32.totalorder %s23, %s26
      %p35 = scmp.eq.s32.totalorder %s18, 1
      %p36 = por %p34, %p35
      %p37 = scmp.ne.s32.totalorder %s26, %s27
      %p38 = scmp.eq.s32.totalorder %s18, 0
      %p39 = por %p37, %p38
      %p40 = scmp.ne.s32.totalorder %s26, %s27
      %p41 = scmp.eq.s32.totalorder %s19, 1
      %p42 = por %p40, %p41
      %p44 = scmp.ne.s32.totalorder %s27, %s43
      %p45 = scmp.eq.s32.totalorder %s19, 0
      %p46 = por %p44, %p45
      %s47 = ssub.s32 %s13, %s20
      %p48 = scmp.eq.s32.totalorder %s47, 0
      %s50 = sadd.s32 %s49, 1
      %s51 = scalar_select %p48, %s49, %s50
      %p54 = pneg %p48
      %p55 = scmp.eq.s32.totalorder %s13, 1
      %p56 = por %p54, %p55
      %p57 = scmp.ne.s32.totalorder %s49, %s52
      %p58 = scmp.eq.s32.totalorder %s13, 0
      %p59 = por %p57, %p58
      %p60 = scmp.ne.s32.totalorder %s49, %s52
      %p61 = scmp.eq.s32.totalorder %s18, 1
      %p62 = por %p60, %p61
      %p63 = scmp.ne.s32.totalorder %s52, %s53
      %p64 = scmp.eq.s32.totalorder %s18, 0
      %p65 = por %p63, %p64
      %p66 = scmp.ne.s32.totalorder %s52, %s53
      %p67 = scmp.eq.s32.totalorder %s19, 1
      %p68 = por %p66, %p67
      %p70 = scmp.ne.s32.totalorder %s53, %s69
      %p71 = scmp.eq.s32.totalorder %s19, 0
      %p72 = por %p70, %p71
      %p73 = scmp.le.s32.totalorder 1, %s13
      %p74 = scmp.lt.s32.totalorder %s13, 3
      %p75 = pnand %p73, %p74
      %p76 = pneg %p75
      // Predicated region
      $region9: #{tpu_custom_call.1} parent=5 // pred_check
        _
      $region10: #{tpu_custom_call.1} parent=5 // pred_check_branch
        %78 = sbr.rel (%p75) target = $region12
      $region11: #{tpu_custom_call.1} parent=5 // pred_region
        %s79 = ssub.s32 %s13, 1
      $region12: #{tpu_custom_call.1} parent=5 // pred_fallthru
        _
      %p80 = scmp.lt.s32.totalorder %s13, 2
      // Predicated region
      $region13: #{tpu_custom_call.1} parent=5 // pred_check
        %p81 = pneg %p80
      $region14: #{tpu_custom_call.1} parent=5 // pred_check_branch
        %83 = sbr.rel (%p81) target = $region16
      $region15: #{tpu_custom_call.1} parent=5 // pred_region
        // Predicated region
        $region17: #{tpu_custom_call.1} parent=15 // pred_check
          %p84 = pneg %p33
        $region18: #{tpu_custom_call.1} parent=15 // pred_check_branch
          %86 = sbr.rel (%p84) target = $region20
        $region19: #{tpu_custom_call.1} parent=15 // pred_region
          #allocation7 [shape = 'u32[6]{0}', space=smem, size = 0x18, scoped, tag = 'DMA stride descriptor']
          %s87 = sand.u32 %s23, 1
          %s88 = scalar_lea.sflag [#allocation3], %s87
          %s89 = sand.u32 %s23, 1
          %s90 = smul.addr %s89, 144
          %s91 = scalar_lea.vmem [#allocation2], %s90
          %s93 = ssub.s32 2304, 2304
          %94 = vsyncadd %s88, %s93
          %s95 = smul.addr %s13, 2
          %s96 = smul.addr %s95, 128
          %s97 = scalar_lea.hbm %s0, %s96
          %s99 = sshll.u32 1, 14
          %s100 = sxor.u32 4294967295, %s99
          %s102 = sld [smem:[#allocation0]]
          %s103 = sadd.s32 2, %s102
          %s105 = sshll.u32 7, 26
          %s106 = sxor.u32 4294967295, %s105
          %s107 = sand.u32 0, %s106
          %s108 = sshll.u32 %s103, 26
          %s109 = sor.u32 %s107, %s108
          %s110 = sshll.u32 %s91, 4
          %s111 = int_to_ptr.vmem [resolvable:$true] %s110
          %117 = sst [smem:[#allocation7]] 512
          %s118 = scalar_lea.smem [#allocation7], 1
          %119 = sst [smem:[%s118]] 256
          %s120 = scalar_lea.smem [#allocation7], 2
          %121 = sst [smem:[%s120]] 2
          %s122 = scalar_lea.smem [#allocation7], 3
          %123 = sst [smem:[%s122]] 128
          %s124 = scalar_lea.smem [#allocation7], 4
          %125 = sst [smem:[%s124]] 128
          %s126 = scalar_lea.smem [#allocation7], 5
          %127 = sst [smem:[%s126]] 8
          %129 = dma.general %s97, 2304, %s111, %s88, [#allocation6], [#allocation7], %s109, 0
        $region20: #{tpu_custom_call.1} parent=15 // pred_fallthru
          _
      $region16: #{tpu_custom_call.1} parent=5 // pred_fallthru
        _
      %p130 = scmp.le.s32.totalorder 1, %s13
      %p131 = scmp.lt.s32.totalorder %s13, 3
      %p132 = pnand %p130, %p131
      %p133 = pneg %p132
      // Predicated region
      $region21: #{tpu_custom_call.1} parent=5 // pred_check
        _
      $region22: #{tpu_custom_call.1} parent=5 // pred_check_branch
        %135 = sbr.rel (%p132) target = $region24
      $region23: #{tpu_custom_call.1} parent=5 // pred_region
        %s136 = ssub.s32 %s13, 1
        %s137 = sand.u32 %s26, 1
        %s138 = scalar_lea.sflag [#allocation3], %s137
        %s139 = sand.u32 %s26, 1
        %s140 = smul.addr %s139, 144
        %s141 = scalar_lea.vmem [#allocation2], %s140
        // Predicated region
        $region25: #{tpu_custom_call.1} parent=23 // pred_check
          %p142 = pneg %p39
        $region26: #{tpu_custom_call.1} parent=23 // pred_check_branch
          %144 = sbr.rel (%p142) target = $region28
        $region27: #{tpu_custom_call.1} parent=23 // pred_region
          %145 = dma.done %s138, 2304
        $region28: #{tpu_custom_call.1} parent=23 // pred_fallthru
          _
        %s146 = sand.u32 %s26, 1
        %s147 = scalar_lea.sflag [#allocation3], %s146
        %s148 = sand.u32 %s26, 1
        %s149 = smul.addr %s148, 144
        %s150 = scalar_lea.vmem [#allocation2], %s149
        %p151 = pneg %p39
        %p152 = pneg %p36
        %p153 = pneg %p65
        %p154 = pneg %p62
        %s155 = sand.u32 %s52, 1
        %s156 = scalar_lea.sflag [#allocation4], %s155
        %s157 = sand.u32 %s52, 1
        %s158 = smul.addr %s157, 48
        %s159 = scalar_lea.vmem [#allocation5], %s158
        %v160 = vld [vmem:[%s141] sm:$0xff]
        %v161 = vld [vmem:[%s141 + $0x8] sm:$0xff]
        %s162 = scalar_lea.vmem %s141, 16 [#allocation2]
        %v163 = vld [vmem:[%s162] sm:$0xff]
        %v164 = vld [vmem:[%s162 + $0x8] sm:$0xff]
        %s165 = scalar_lea.vmem %s141, 32 [#allocation2]
        %v166 = vld [vmem:[%s165] sm:$0xff]
        %v167 = vld [vmem:[%s165 + $0x8] sm:$0xff]
        %s168 = scalar_lea.vmem %s141, 48 [#allocation2]
        %v169 = vld [vmem:[%s168] sm:$0xff]
        %v170 = vld [vmem:[%s168 + $0x8] sm:$0xff]
        %s171 = scalar_lea.vmem %s141, 64 [#allocation2]
        %v172 = vld [vmem:[%s171] sm:$0xff]
        %v173 = vld [vmem:[%s171 + $0x8] sm:$0xff]
        %s174 = scalar_lea.vmem %s141, 80 [#allocation2]
        %v175 = vld [vmem:[%s174] sm:$0xff]
        %v176 = vld [vmem:[%s174 + $0x8] sm:$0xff]
        %s177 = scalar_lea.vmem %s141, 96 [#allocation2]
        %v178 = vld [vmem:[%s177] sm:$0xff]
        %v179 = vld [vmem:[%s177 + $0x8] sm:$0xff]
        %s180 = scalar_lea.vmem %s141, 112 [#allocation2]
        %v181 = vld [vmem:[%s180] sm:$0xff]
        %v182 = vld [vmem:[%s180 + $0x8] sm:$0xff]
        %s183 = scalar_lea.vmem %s141, 128 [#allocation2]
        %v184 = vld [vmem:[%s183] sm:$0xff]
        %v185 = vld [vmem:[%s183 + $0x8] sm:$0xff]
        %v186 = vsub.f32 %v169, %v160
        %v187 = vsub.f32 %v170, %v161
        %v188 = vsub.f32 %v172, %v163
        %v189 = vsub.f32 %v173, %v164
        %v190 = vsub.f32 %v175, %v166
        %v191 = vsub.f32 %v176, %v167
        %v192 = vsub.f32 %v178, %v160
        %v193 = vsub.f32 %v179, %v161
        %v194 = vsub.f32 %v181, %v163
        %v195 = vsub.f32 %v182, %v164
        %v196 = vsub.f32 %v184, %v166
        %v197 = vsub.f32 %v185, %v167
        %v198 = vmul.f32 %v188, %v196
        %v199 = vmul.f32 %v189, %v197
        %v200 = vmul.f32 %v190, %v194
        %v201 = vmul.f32 %v191, %v195
        %v202 = vsub.f32 %v198, %v200
        %v203 = vsub.f32 %v199, %v201
        %v204 = vmul.f32 %v190, %v192
        %v205 = vmul.f32 %v191, %v193
        %v206 = vmul.f32 %v186, %v196
        %v207 = vmul.f32 %v187, %v197
        %v208 = vsub.f32 %v204, %v206
        %v209 = vsub.f32 %v205, %v207
        %v210 = vmul.f32 %v186, %v194
        %v211 = vmul.f32 %v187, %v195
        %v212 = vmul.f32 %v188, %v192
        %v213 = vmul.f32 %v189, %v193
        %v214 = vsub.f32 %v210, %v212
        %v215 = vsub.f32 %v211, %v213
        %v216 = vmul.f32 %v202, %v202
        %v217 = vmul.f32 %v203, %v203
        %v218 = vmul.f32 %v208, %v208
        %v219 = vmul.f32 %v209, %v209
        %v220 = vadd.f32 %v216, %v218
        %v221 = vadd.f32 %v217, %v219
        %v222 = vmul.f32 %v214, %v214
        %v223 = vmul.f32 %v215, %v215
        %v224 = vadd.f32 %v220, %v222
        %v225 = vadd.f32 %v221, %v223
        %v226 = vmax.f32 %v224, 1e-24
        %v227 = vmax.f32 %v225, 1e-24
        %v228 = vrsqrt.pop %v226
        %v229 = vrsqrt.pop %v227
        %v230 = vmul.f32 %v202, %v228
        %v231 = vmul.f32 %v203, %v229
        %232 = vst [vmem:[%s159] sm:$0xff] %v230
        %233 = vst [vmem:[%s159 + $0x8] sm:$0xff] %v231
        %v234 = vmul.f32 %v208, %v228
        %v235 = vmul.f32 %v209, %v229
        %s236 = scalar_lea.vmem %s159, 16 [#allocation5]
        %237 = vst [vmem:[%s236] sm:$0xff] %v234
        %238 = vst [vmem:[%s236 + $0x8] sm:$0xff] %v235
        %v239 = vmul.f32 %v214, %v228
        %v240 = vmul.f32 %v215, %v229
        %s241 = scalar_lea.vmem %s159, 32 [#allocation5]
        %242 = vst [vmem:[%s241] sm:$0xff] %v239
        %243 = vst [vmem:[%s241 + $0x8] sm:$0xff] %v240
        %s244 = sand.u32 %s52, 1
        %s245 = scalar_lea.sflag [#allocation4], %s244
        %s246 = sand.u32 %s52, 1
        %s247 = smul.addr %s246, 48
        %s248 = scalar_lea.vmem [#allocation5], %s247
        // Predicated region
        $region29: #{tpu_custom_call.1} parent=23 // pred_check
          %p249 = pneg %p62
        $region30: #{tpu_custom_call.1} parent=23 // pred_check_branch
          %251 = sbr.rel (%p249) target = $region32
        $region31: #{tpu_custom_call.1} parent=23 // pred_region
          #allocation9 [shape = 'u32[6]{0}', space=smem, size = 0x18, scoped, tag = 'DMA stride descriptor']
          %s253 = ssub.s32 768, 768
          %254 = vsyncadd %s245, %s253
          %s255 = smul.addr %s18, 2
          %s256 = smul.addr %s255, 128
          %s257 = scalar_lea.hbm %s1, %s256
          %s259 = sshll.u32 1, 14
          %s260 = sxor.u32 4294967295, %s259
          %s263 = sshll.u32 7, 18
          %s264 = sxor.u32 4294967295, %s263
          %s265 = sand.u32 0, %s264
          %s267 = sor.u32 %s265, 0
          %s269 = sshll.u32 3, 24
          %s270 = sxor.u32 4294967295, %s269
          %s271 = sand.u32 %s267, %s270
          %s273 = sor.u32 %s271, 0
          %s274 = sshll.u32 %s248, 4
          %s275 = int_to_ptr.vmem [resolvable:$true] %s274
          %281 = sst [smem:[#allocation9]] 256
          %s282 = scalar_lea.smem [#allocation9], 1
          %283 = sst [smem:[%s282]] 512
          %s284 = scalar_lea.smem [#allocation9], 2
          %285 = sst [smem:[%s284]] 2
          %s286 = scalar_lea.smem [#allocation9], 3
          %287 = sst [smem:[%s286]] 128
          %s288 = scalar_lea.smem [#allocation9], 4
          %289 = sst [smem:[%s288]] 128
          %s290 = scalar_lea.smem [#allocation9], 5
          %291 = sst [smem:[%s290]] 8
          %293 = dma.general %s275, 768, %s257, %s245, [#allocation8], [#allocation9], %s273, 0
        $region32: #{tpu_custom_call.1} parent=23 // pred_fallthru
          _
      $region24: #{tpu_custom_call.1} parent=5 // pred_fallthru
        _
      %p294 = scmp.le.s32.totalorder 2, %s13
      // Predicated region
      $region33: #{tpu_custom_call.1} parent=5 // pred_check
        %p295 = pneg %p294
      $region34: #{tpu_custom_call.1} parent=5 // pred_check_branch
        %297 = sbr.rel (%p295) target = $region36
      $region35: #{tpu_custom_call.1} parent=5 // pred_region
        %s298 = ssub.s32 %s13, 2
        // Predicated region
        $region37: #{tpu_custom_call.1} parent=35 // pred_check
          %p299 = pneg %p68
        $region38: #{tpu_custom_call.1} parent=35 // pred_check_branch
          %301 = sbr.rel (%p299) target = $region40
        $region39: #{tpu_custom_call.1} parent=35 // pred_region
          %s302 = sand.u32 %s53, 1
          %s303 = scalar_lea.sflag [#allocation4], %s302
          %s304 = sand.u32 %s53, 1
          %s305 = smul.addr %s304, 48
          %s306 = scalar_lea.vmem [#allocation5], %s305
          %307 = dma.done %s303, 768
        $region40: #{tpu_custom_call.1} parent=35 // pred_fallthru
          _
      $region36: #{tpu_custom_call.1} parent=5 // pred_fallthru
        _
    $region6: #{tpu_custom_call.1} parent=1 // loop_footer
      %s17 = sadd.s32 1, %s13
    $region7: #{tpu_custom_call.1} parent=1 // loop_footer_branch
      %12 = sbr.rel target = $region3
    $region8: #{tpu_custom_call.1} parent=1 // loop_exit
      _
    %308 = vsyncpa [#allocation3], 1
    %s309 = scalar_lea.sflag [#allocation3], 1
    %310 = vsyncpa %s309, 1
    %311 = vsyncpa [#allocation4], 1
    %s312 = scalar_lea.sflag [#allocation4], 1
    %313 = vsyncpa %s312, 1

</llo_original>
